<compile_context>
chip_gen: v6e
topology: v6e:2x2x1
jax: 0.10.0
libtpu: 0.0.40
codegen_flags: <defaults>
</compile_context>

<pallas_src>
import functools
from typing import NamedTuple

import jax
import jax.numpy as jnp
from jax.experimental import pallas as pl
from jax.experimental.pallas import tpu as pltpu

HIDDEN = 256


class ActorDims(NamedTuple):
    input_dim: int
    n_actions: int
    hidden: int
    k_pad: int
    n_pad: int


def _round_up(n, m):
    return ((n + m - 1) // m) * m


def _pad2(a, shape):
    return jnp.pad(a, [(0, s - d) for d, s in zip(a.shape, shape)])


def actor_kernel(valid_rows_ref, x_ref, w1_ref, w2_ref, w3_ref, b_ref, out_ref,
                 *, hidden, n_pad):
    x = x_ref[...]                                   # (B_pad, K_pad) f32

    # Static, 128-aligned slices into the packed bias buffer.
    b1 = b_ref[:, 0:hidden]
    b2 = b_ref[:, hidden:2 * hidden]
    b3 = b_ref[:, 2 * hidden:2 * hidden + n_pad]

    # fc1 + ReLU (bf16 MXU inputs, f32 accumulation)
    h1 = jnp.dot(x.astype(jnp.bfloat16), w1_ref[...],
                 preferred_element_type=jnp.float32) + b1
    h1 = jnp.maximum(h1, 0.0)

    # fc2 + ReLU
    h2 = jnp.dot(h1.astype(jnp.bfloat16), w2_ref[...],
                 preferred_element_type=jnp.float32) + b2
    h2 = jnp.maximum(h2, 0.0)

    # fc3
    logits = jnp.dot(h2.astype(jnp.bfloat16), w3_ref[...],
                     preferred_element_type=jnp.float32) + b3

    # softmax over dim=0 (batch axis), matching F.softmax(x, dim=0).
    # Max over ALL rows (>= the true per-column max) keeps exp() <= 1; padded
    # rows are simply excluded from the denominator via the row mask and are
    # sliced off in the wrapper.
    valid = valid_rows_ref[0]
    rows = jax.lax.broadcasted_iota(jnp.int32, logits.shape, 0)
    row_mask = (rows < valid).astype(jnp.float32)

    m = jnp.max(logits, axis=0, keepdims=True)
    e = jnp.exp(logits - m)
    denom = jnp.sum(e * row_mask, axis=0, keepdims=True)
    out_ref[...] = e * pl.reciprocal(denom, approx=False)


def prepare_params(params, input_dim, n_actions, hidden=HIDDEN):
    """One-time layout prep (NOT per call): pad weights to (8,128)-aligned
    shapes, store weights in bf16, pack the three biases into a single
    lane-dense f32 buffer."""
    w1, b1, w2, b2, w3, b3 = params
    k_pad = _round_up(input_dim, 128)
    n_pad = _round_up(n_actions, 128)

    w1_p = _pad2(w1.astype(jnp.bfloat16), (k_pad, hidden))   # zero rows: no contribution
    w2_p = w2.astype(jnp.bfloat16)
    w3_p = _pad2(w3.astype(jnp.bfloat16), (hidden, n_pad))   # zero cols: sliced off later

    b_packed = jnp.zeros((1, 2 * hidden + n_pad), jnp.float32)
    b_packed = b_packed.at[:, 0:hidden].set(b1.reshape(1, hidden))
    b_packed = b_packed.at[:, hidden:2 * hidden].set(b2.reshape(1, hidden))
    b_packed = b_packed.at[:, 2 * hidden:2 * hidden + n_actions].set(
        b3.reshape(1, n_actions))

    arrays = (w1_p, w2_p, w3_p, b_packed)
    dims = ActorDims(input_dim=input_dim, n_actions=n_actions, hidden=hidden,
                     k_pad=k_pad, n_pad=n_pad)
    return arrays, dims


def actor_forward(x, arrays, dims):
    """x: (B, input_dim) f32 -> (B, n_actions) probs (softmax over dim=0)."""
    w1_p, w2_p, w3_p, b_packed = arrays
    B = x.shape[0]
    B_pad = _round_up(max(B, 1), 8)

    # Per-call work in the wrapper is only padding x (tiny).
    x_p = _pad2(x.astype(jnp.float32), (B_pad, dims.k_pad))
    valid_rows = jnp.array([B], dtype=jnp.int32)

    kernel = functools.partial(actor_kernel, hidden=dims.hidden, n_pad=dims.n_pad)

    flops = 2 * B_pad * (dims.k_pad * dims.hidden
                         + dims.hidden * dims.hidden
                         + dims.hidden * dims.n_pad)
    bytes_accessed = (x_p.size * 4 + w1_p.size * 2 + w2_p.size * 2
                      + w3_p.size * 2 + b_packed.size * 4
                      + B_pad * dims.n_pad * 4)
    cost = pl.CostEstimate(flops=flops,
                           transcendentals=B_pad * dims.n_pad,
                           bytes_accessed=bytes_accessed)

    grid_spec = pltpu.PrefetchScalarGridSpec(
        num_scalar_prefetch=1,
        grid=(1,),
        in_specs=[
            pl.BlockSpec((B_pad, dims.k_pad), lambda i, vr: (0, 0)),
            pl.BlockSpec((dims.k_pad, dims.hidden), lambda i, vr: (0, 0)),
            pl.BlockSpec((dims.hidden, dims.hidden), lambda i, vr: (0, 0)),
            pl.BlockSpec((dims.hidden, dims.n_pad), lambda i, vr: (0, 0)),
            pl.BlockSpec(b_packed.shape, lambda i, vr: (0, 0)),
        ],
        out_specs=pl.BlockSpec((B_pad, dims.n_pad), lambda i, vr: (0, 0)),
    )

    out = pl.pallas_call(
        kernel,
        out_shape=jax.ShapeDtypeStruct((B_pad, dims.n_pad), jnp.float32),
        grid_spec=grid_spec,
        compiler_params=pltpu.CompilerParams(
            dimension_semantics=("arbitrary",)),
        cost_estimate=cost,
    )(valid_rows, x_p, w1_p, w2_p, w3_p, b_packed)

    return out[:B, :dims.n_actions]


def init_params(key, input_dim, n_actions, hidden=HIDDEN):
    ks = jax.random.split(key, 6)

    # Deterministic synthetic init (uniform, roughly PyTorch-Linear-like scale).
    def u(k, shape, fan_in):
        bound = 1.0 / jnp.sqrt(fan_in)
        return jax.random.uniform(k, shape, jnp.float32, -bound, bound)

    w1 = u(ks[0], (input_dim, hidden), input_dim)
    b1 = u(ks[1], (1, hidden), input_dim)
    w2 = u(ks[2], (hidden, hidden), hidden)
    b2 = u(ks[3], (1, hidden), hidden)
    w3 = u(ks[4], (hidden, n_actions), hidden)
    b3 = u(ks[5], (1, n_actions), hidden)
    return (w1, b1, w2, b2, w3, b3)


def actor_reference(x, params):
    # Pure-JAX reference with the same bf16 quantization of matmul inputs
    # (f32 accumulation), exact softmax over dim=0.
    w1, b1, w2, b2, w3, b3 = params
    bf, f32 = jnp.bfloat16, jnp.float32

    def q(a):
        return a.astype(bf).astype(f32)

    h1 = jnp.maximum(q(x) @ q(w1) + b1, 0.0)
    h2 = jnp.maximum(q(h1) @ q(w2) + b2, 0.0)
    logits = q(h2) @ q(w3) + b3
    return jax.nn.softmax(logits, axis=0)


if __name__ == "__main__":
    key = jax.random.PRNGKey(0)
    k_x, k_p = jax.random.split(key)

    batch = 2
    input_dim = 32
    n_actions = 8

    x = jax.random.normal(k_x, (batch, input_dim), jnp.float32)
    raw_params = init_params(k_p, input_dim, n_actions)

    # One-time layout prep (padding, bf16 cast, bias packing).
    arrays, dims = prepare_params(raw_params, input_dim, n_actions)

    fwd = jax.jit(actor_forward, static_argnames=("dims",))
    probs = jax.block_until_ready(fwd(x, arrays, dims=dims))

    ref = actor_reference(x, raw_params)
    assert probs.shape == (batch, n_actions)
    # Tolerance covers bf16 matmul inputs (f32 accumulation).
    assert jnp.allclose(probs, ref, atol=5e-3, rtol=5e-3)
    # Columns of a dim-0 softmax sum to 1 (exact reciprocal in kernel).
    assert jnp.allclose(jnp.sum(probs, axis=0), jnp.ones((n_actions,)), atol=1e-3)

    print("KERNEL_OK")
</pallas_src>

<mosaic_0001>
module attributes {stable_mosaic.version = 11 : i64} {
  func.func @actor_kernel(%arg0: i32, %arg1: memref<1xi32, #tpu.memory_space<smem>>, %arg2: memref<8x128xf32, #tpu.memory_space<vmem>>, %arg3: memref<128x256xbf16, #tpu.memory_space<vmem>>, %arg4: memref<256x256xbf16, #tpu.memory_space<vmem>>, %arg5: memref<256x128xbf16, #tpu.memory_space<vmem>>, %arg6: memref<1x640xf32, #tpu.memory_space<vmem>>, %arg7: memref<8x128xf32, #tpu.memory_space<vmem>>) attributes {dimension_semantics = [#tpu.dimension_semantics<arbitrary>], iteration_bounds = array<i64: 1>, scalar_prefetch = 1 : i64, scratch_operands = 0 : i64, tpu.core_type = #tpu.core_type<tc>, window_params = [{pipeline_mode = #tpu.pipeline_mode<synchronous>, transform_indices = @transform_0, window_bounds = array<i64: 8, 128>}, {pipeline_mode = #tpu.pipeline_mode<synchronous>, transform_indices = @transform_1, window_bounds = array<i64: 128, 256>}, {pipeline_mode = #tpu.pipeline_mode<synchronous>, transform_indices = @transform_2, window_bounds = array<i64: 256, 256>}, {pipeline_mode = #tpu.pipeline_mode<synchronous>, transform_indices = @transform_3, window_bounds = array<i64: 256, 128>}, {pipeline_mode = #tpu.pipeline_mode<synchronous>, transform_indices = @transform_4, window_bounds = array<i64: 1, 640>}, {pipeline_mode = #tpu.pipeline_mode<synchronous>, transform_indices = @transform_5, window_bounds = array<i64: 8, 128>}]} {
    %c0 = arith.constant 0 : index
    %c0_0 = arith.constant 0 : index
    %0 = vector.load %arg2[%c0, %c0_0] : memref<8x128xf32, #tpu.memory_space<vmem>>, vector<8x128xf32>
    %c0_1 = arith.constant 0 : index
    %c0_2 = arith.constant 0 : index
    %1 = vector.load %arg6[%c0_1, %c0_2] : memref<1x640xf32, #tpu.memory_space<vmem>>, vector<1x256xf32>
    %c0_3 = arith.constant 0 : index
    %c256 = arith.constant 256 : index
    %2 = vector.load %arg6[%c0_3, %c256] : memref<1x640xf32, #tpu.memory_space<vmem>>, vector<1x256xf32>
    %c0_4 = arith.constant 0 : index
    %c512 = arith.constant 512 : index
    %3 = vector.load %arg6[%c0_4, %c512] : memref<1x640xf32, #tpu.memory_space<vmem>>, vector<1x128xf32>
    %4 = arith.truncf %0 : vector<8x128xf32> to vector<8x128xbf16>
    %c0_5 = arith.constant 0 : index
    %c0_6 = arith.constant 0 : index
    %5 = vector.load %arg3[%c0_5, %c0_6] : memref<128x256xbf16, #tpu.memory_space<vmem>>, vector<128x256xbf16>
    %cst = arith.constant dense<0.000000e+00> : vector<8x256xf32>
    %6 = tpu.matmul %4, %5, %cst {dimension_numbers = #tpu.dot_dimension_numbers<[1], [0], [0], [1], [0, 0, 1, 1], [], []>} : vector<8x128xbf16>, vector<128x256xbf16>, vector<8x256xf32> -> vector<8x256xf32>
    %7 = vector.broadcast %1 : vector<1x256xf32> to vector<8x256xf32>
    %8 = arith.addf %6, %7 : vector<8x256xf32>
    %cst_7 = arith.constant 0.000000e+00 : f32
    %9 = vector.broadcast %cst_7 : f32 to vector<8x256xf32>
    %10 = arith.maximumf %8, %9 : vector<8x256xf32>
    %11 = arith.truncf %10 : vector<8x256xf32> to vector<8x256xbf16>
    %c0_8 = arith.constant 0 : index
    %c0_9 = arith.constant 0 : index
    %12 = vector.load %arg4[%c0_8, %c0_9] : memref<256x256xbf16, #tpu.memory_space<vmem>>, vector<256x256xbf16>
    %cst_10 = arith.constant dense<0.000000e+00> : vector<8x256xf32>
    %13 = tpu.matmul %11, %12, %cst_10 {dimension_numbers = #tpu.dot_dimension_numbers<[1], [0], [0], [1], [0, 0, 1, 1], [], []>} : vector<8x256xbf16>, vector<256x256xbf16>, vector<8x256xf32> -> vector<8x256xf32>
    %14 = vector.broadcast %2 : vector<1x256xf32> to vector<8x256xf32>
    %15 = arith.addf %13, %14 : vector<8x256xf32>
    %cst_11 = arith.constant 0.000000e+00 : f32
    %16 = vector.broadcast %cst_11 : f32 to vector<8x256xf32>
    %17 = arith.maximumf %15, %16 : vector<8x256xf32>
    %18 = arith.truncf %17 : vector<8x256xf32> to vector<8x256xbf16>
    %c0_12 = arith.constant 0 : index
    %c0_13 = arith.constant 0 : index
    %19 = vector.load %arg5[%c0_12, %c0_13] : memref<256x128xbf16, #tpu.memory_space<vmem>>, vector<256x128xbf16>
    %cst_14 = arith.constant dense<0.000000e+00> : vector<8x128xf32>
    %20 = tpu.matmul %18, %19, %cst_14 {dimension_numbers = #tpu.dot_dimension_numbers<[1], [0], [0], [1], [0, 0, 1, 1], [], []>} : vector<8x256xbf16>, vector<256x128xbf16>, vector<8x128xf32> -> vector<8x128xf32>
    %21 = vector.broadcast %3 : vector<1x128xf32> to vector<8x128xf32>
    %22 = arith.addf %20, %21 : vector<8x128xf32>
    %c0_15 = arith.constant 0 : index
    %23 = memref.load %arg1[%c0_15] : memref<1xi32, #tpu.memory_space<smem>>
    %24 = tpu.iota {dimensions = array<i32: 0>} : vector<8x128xi32>
    %25 = vector.broadcast %23 : i32 to vector<8x128xi32>
    %26 = arith.cmpi slt, %24, %25 : vector<8x128xi32>
    %27 = arith.extui %26 : vector<8x128xi1> to vector<8x128xi32>
    %28 = arith.sitofp %27 : vector<8x128xi32> to vector<8x128xf32>
    %cst_16 = arith.constant dense<0xFF800000> : vector<128xf32>
    %29 = vector.multi_reduction <maximumf>, %22, %cst_16 [0] : vector<8x128xf32> to vector<128xf32>
    %30 = vector.shape_cast %29 : vector<128xf32> to vector<1x128xf32>
    %31 = vector.broadcast %30 : vector<1x128xf32> to vector<8x128xf32>
    %32 = arith.subf %22, %31 : vector<8x128xf32>
    %33 = math.exp %32 : vector<8x128xf32>
    %34 = arith.mulf %33, %28 : vector<8x128xf32>
    %cst_17 = arith.constant dense<0.000000e+00> : vector<128xf32>
    %35 = vector.multi_reduction <add>, %34, %cst_17 [0] : vector<8x128xf32> to vector<128xf32>
    %36 = vector.shape_cast %35 : vector<128xf32> to vector<1x128xf32>
    %37 = tpu.reciprocal %36 : vector<1x128xf32> -> vector<1x128xf32>
    %38 = vector.broadcast %37 : vector<1x128xf32> to vector<8x128xf32>
    %39 = arith.mulf %33, %38 : vector<8x128xf32>
    %c0_18 = arith.constant 0 : index
    %c0_19 = arith.constant 0 : index
    %40 = vector.load %arg7[%c0_18, %c0_19] : memref<8x128xf32, #tpu.memory_space<vmem>>, vector<8x128xf32>
    tpu.vector_store %arg7[%c0_18, %c0_19], %39 {strides = array<i32>} : memref<8x128xf32, #tpu.memory_space<vmem>>, vector<8x128xf32>,
    return
  }
  func.func @transform_0(%arg0: i32, %arg1: memref<1xi32, #tpu.memory_space<smem>>) -> (i32, i32) {
    %c0_i32 = arith.constant 0 : i32
    %c0_i32_0 = arith.constant 0 : i32
    %c0_i32_1 = arith.constant 0 : i32
    return %c0_i32, %c0_i32_0 : i32, i32
  }
  func.func @transform_1(%arg0: i32, %arg1: memref<1xi32, #tpu.memory_space<smem>>) -> (i32, i32) {
    %c0_i32 = arith.constant 0 : i32
    %c0_i32_0 = arith.constant 0 : i32
    %c0_i32_1 = arith.constant 0 : i32
    return %c0_i32, %c0_i32_0 : i32, i32
  }
  func.func @transform_2(%arg0: i32, %arg1: memref<1xi32, #tpu.memory_space<smem>>) -> (i32, i32) {
    %c0_i32 = arith.constant 0 : i32
    %c0_i32_0 = arith.constant 0 : i32
    %c0_i32_1 = arith.constant 0 : i32
    return %c0_i32, %c0_i32_0 : i32, i32
  }
  func.func @transform_3(%arg0: i32, %arg1: memref<1xi32, #tpu.memory_space<smem>>) -> (i32, i32) {
    %c0_i32 = arith.constant 0 : i32
    %c0_i32_0 = arith.constant 0 : i32
    %c0_i32_1 = arith.constant 0 : i32
    return %c0_i32, %c0_i32_0 : i32, i32
  }
  func.func @transform_4(%arg0: i32, %arg1: memref<1xi32, #tpu.memory_space<smem>>) -> (i32, i32) {
    %c0_i32 = arith.constant 0 : i32
    %c0_i32_0 = arith.constant 0 : i32
    %c0_i32_1 = arith.constant 0 : i32
    return %c0_i32, %c0_i32_0 : i32, i32
  }
  func.func @transform_5(%arg0: i32, %arg1: memref<1xi32, #tpu.memory_space<smem>>) -> (i32, i32) {
    %c0_i32 = arith.constant 0 : i32
    %c0_i32_0 = arith.constant 0 : i32
    %c0_i32_1 = arith.constant 0 : i32
    return %c0_i32, %c0_i32_0 : i32, i32
  }
}

</mosaic_0001>

<llo_original>
// kernel: actor_forward.1
$region0: #{actor_forward.1}
  #allocation0 [shape = 'u32[]', space=smem, size = 0x4, offset = 0x4, fixed_abs, tag = 'smem constant byte address 0x4 - core index']
  #allocation1 [shape = 'u32[144,128]{1,0:T(1,128)}', space=vmem, size = 0x12000, scoped, tag = 'internal scratch']
  #allocation2 [shape = 's32[1]{0}', space=sflag, size = 0x4, scoped, tag = 'scoped memory for actor_forward.1']
  #allocation3 [shape = 's32[1]{0:T(128)S(6)}', space=smem, size = 0x200, scoped, tag = 'prefetched SMEM operand 0']
  %s0 = inlined_call_operand.<no memory space> [shape: s32[1], index: 0, kind: input, shape index: {}]
  %s1 = inlined_call_operand.vmem [shape: f32[8,128], index: 1, kind: input, shape index: {}]
  %s2 = inlined_call_operand.hbm [shape: bf16[128,256], index: 2, kind: input, shape index: {}]
  %s3 = inlined_call_operand.hbm [shape: bf16[256,256], index: 3, kind: input, shape index: {}]
  %s4 = inlined_call_operand.hbm [shape: bf16[256,128], index: 4, kind: input, shape index: {}]
  %s5 = inlined_call_operand.vmem [shape: f32[1,640], index: 5, kind: input, shape index: {}]
  %s6 = inlined_call_operand.vmem [shape: f32[8,128], index: 6, kind: output, shape index: {}]
  %s7 = sld [smem:[#allocation0]]
  $region42: #{actor_forward.1} parent=0
    _
  %s9 = ssub.s32 1, %s7
  %s10 = scalar_select 0, %s9, %s7
  %11 = sst [smem:[#allocation3]] %s0
  $region1: #{actor_forward.1} parent=0
    #allocation4 [shape = 'u8[65536]{0}', space=vmem, size = 0x10000, scoped, tag = 'input window, operand 2, single buffered']
    #allocation5 [shape = 's32[1]{0}', space=sflag, size = 0x4, scoped, tag = 'scoped memory for actor_forward.1']
    #allocation6 [shape = 'u8[131072]{0}', space=vmem, size = 0x20000, scoped, tag = 'input window, operand 3, single buffered']
    #allocation7 [shape = 's32[1]{0}', space=sflag, size = 0x4, scoped, tag = 'scoped memory for actor_forward.1']
    #allocation8 [shape = 'u8[65536]{0}', space=vmem, size = 0x10000, scoped, tag = 'input window, operand 4, single buffered']
    %12 = vsyncpa [#allocation5], 0
    %13 = vsyncpa [#allocation7], 0
    // Predicated region
    $region2: #{actor_forward.1} parent=1 // pred_check
      _
    $region3: #{actor_forward.1} parent=1 // pred_check_branch
      %15 = sbr.rel (0) target = $region5
    $region4: #{actor_forward.1} parent=1 // pred_region
      _
    $region5: #{actor_forward.1} parent=1 // pred_fallthru
      _
    // Predicated region
    $region6: #{actor_forward.1} parent=1 // pred_check
      _
    $region7: #{actor_forward.1} parent=1 // pred_check_branch
      %17 = sbr.rel (0) target = $region9
    $region8: #{actor_forward.1} parent=1 // pred_region
      %s19 = ssub.s32 2048, 2048
      %20 = vsyncadd [#allocation5], %s19
      %s21 = sshll.u32 [#allocation4], 4
      %s22 = int_to_ptr.vmem [resolvable:$true] %s21
      %27 = dma.hbm_to_vmem [thread:$0]  %s2, 2048, %s22, [#allocation5], 128, 128, 8
    $region9: #{actor_forward.1} parent=1 // pred_fallthru
      _
    // Predicated region
    $region10: #{actor_forward.1} parent=1 // pred_check
      _
    $region11: #{actor_forward.1} parent=1 // pred_check_branch
      %29 = sbr.rel (0) target = $region13
    $region12: #{actor_forward.1} parent=1 // pred_region
      %s31 = ssub.s32 4096, 4096
      %32 = vsyncadd [#allocation7], %s31
      %s33 = sshll.u32 [#allocation6], 4
      %s34 = int_to_ptr.vmem [resolvable:$true] %s33
      %39 = dma.hbm_to_vmem [thread:$0]  %s3, 4096, %s34, [#allocation7], 128, 128, 8
    $region13: #{actor_forward.1} parent=1 // pred_fallthru
      _
    // Predicated region
    $region14: #{actor_forward.1} parent=1 // pred_check
      _
    $region15: #{actor_forward.1} parent=1 // pred_check_branch
      %41 = sbr.rel (0) target = $region17
    $region16: #{actor_forward.1} parent=1 // pred_region
      %s43 = ssub.s32 2048, 2048
      %44 = vsyncadd [#allocation7], %s43
      %s45 = sshll.u32 [#allocation8], 4
      %s46 = int_to_ptr.vmem [resolvable:$true] %s45
      %51 = dma.hbm_to_vmem [thread:$0]  %s4, 2048, %s46, [#allocation7], 64, 64, 4
    $region17: #{actor_forward.1} parent=1 // pred_fallthru
      _
    // Predicated region
    $region18: #{actor_forward.1} parent=1 // pred_check
      _
    $region19: #{actor_forward.1} parent=1 // pred_check_branch
      %53 = sbr.rel (0) target = $region21
    $region20: #{actor_forward.1} parent=1 // pred_region
      _
    $region21: #{actor_forward.1} parent=1 // pred_fallthru
      _
    // Predicated region
    $region22: #{actor_forward.1} parent=1 // pred_check
      _
    $region23: #{actor_forward.1} parent=1 // pred_check_branch
      %55 = sbr.rel (0) target = $region25
    $region24: #{actor_forward.1} parent=1 // pred_region
      %56 = dma.done [#allocation5], 2048
    $region25: #{actor_forward.1} parent=1 // pred_fallthru
      _
    // Predicated region
    $region26: #{actor_forward.1} parent=1 // pred_check
      _
    $region27: #{actor_forward.1} parent=1 // pred_check_branch
      %58 = sbr.rel (0) target = $region29
    $region28: #{actor_forward.1} parent=1 // pred_region
      %59 = dma.done [#allocation7], 4096
    $region29: #{actor_forward.1} parent=1 // pred_fallthru
      _
    // Predicated region
    $region30: #{actor_forward.1} parent=1 // pred_check
      _
    $region31: #{actor_forward.1} parent=1 // pred_check_branch
      %61 = sbr.rel (0) target = $region33
    $region32: #{actor_forward.1} parent=1 // pred_region
      %62 = dma.done [#allocation7], 2048
    $region33: #{actor_forward.1} parent=1 // pred_fallthru
      _
    %v64 = vld [vmem:[%s1] sm:$0xff]
    %v65 = vld [vmem:[%s5] sm:$0x3]
    %v66 = vld [vmem:[%s5 + $0x2] sm:$0x3]
    %v67 = vld [vmem:[%s5 + $0x4] sm:$0x1]
    %v68 = vpack.c.bf16 %v64, %v64
    %v69 = vld [vmem:[#allocation4] sm:$0xff]
    %v70 = vld [vmem:[#allocation4 + $0x8] sm:$0xff]
    %v71 = vld [vmem:[#allocation4 + $0x10] sm:$0xff]
    %v72 = vld [vmem:[#allocation4 + $0x18] sm:$0xff]
    %v73 = vld [vmem:[#allocation4 + $0x20] sm:$0xff]
    %v74 = vld [vmem:[#allocation4 + $0x28] sm:$0xff]
    %v75 = vld [vmem:[#allocation4 + $0x30] sm:$0xff]
    %v76 = vld [vmem:[#allocation4 + $0x38] sm:$0xff]
    %v77 = vld [vmem:[#allocation4 + $0x40] sm:$0xff]
    %v78 = vld [vmem:[#allocation4 + $0x48] sm:$0xff]
    %v79 = vld [vmem:[#allocation4 + $0x50] sm:$0xff]
    %v80 = vld [vmem:[#allocation4 + $0x58] sm:$0xff]
    %v81 = vld [vmem:[#allocation4 + $0x60] sm:$0xff]
    %v82 = vld [vmem:[#allocation4 + $0x68] sm:$0xff]
    %v83 = vld [vmem:[#allocation4 + $0x70] sm:$0xff]
    %v84 = vld [vmem:[#allocation4 + $0x78] sm:$0xff]
    %v86 = vlaneseq
    %v87 = vshrl.u32 %v86, 7
    %v88 = vsub.s32 0, %v87
    %v89 = vrot.slane %v65, %v88
    %v90 = vlaneseq
    %v91 = vshrl.u32 %v90, 7
    %v92 = vsub.s32 1, %v91
    %v93 = vrot.slane %v65, %v92
    %v112 = vunpack.c.l.b16 %v69
    %v113 = vunpack.c.h.b16 %v69
    %v114 = vunpack.c.l.b16 %v70
    %v115 = vunpack.c.h.b16 %v70
    %v116 = vunpack.c.l.b16 %v71
    %v117 = vunpack.c.h.b16 %v71
    %v118 = vunpack.c.l.b16 %v72
    %v119 = vunpack.c.h.b16 %v72
    %v120 = vunpack.c.l.b16 %v73
    %v121 = vunpack.c.h.b16 %v73
    %v122 = vunpack.c.l.b16 %v74
    %v123 = vunpack.c.h.b16 %v74
    %v124 = vunpack.c.l.b16 %v75
    %v125 = vunpack.c.h.b16 %v75
    %v126 = vunpack.c.l.b16 %v76
    %v127 = vunpack.c.h.b16 %v76
    %v128 = vunpack.c.l.b16 %v77
    %v129 = vunpack.c.h.b16 %v77
    %v130 = vunpack.c.l.b16 %v78
    %v131 = vunpack.c.h.b16 %v78
    %v132 = vunpack.c.l.b16 %v79
    %v133 = vunpack.c.h.b16 %v79
    %v134 = vunpack.c.l.b16 %v80
    %v135 = vunpack.c.h.b16 %v80
    %v136 = vunpack.c.l.b16 %v81
    %v137 = vunpack.c.h.b16 %v81
    %v138 = vunpack.c.l.b16 %v82
    %v139 = vunpack.c.h.b16 %v82
    %v140 = vunpack.c.l.b16 %v83
    %v141 = vunpack.c.h.b16 %v83
    %v142 = vunpack.c.l.b16 %v84
    %v143 = vunpack.c.h.b16 %v84
    %v144 = vpack.c.b16 %v114, %v112
    %v145 = vpack.c.b16 %v115, %v113
    %v146 = vpack.c.b16 %v118, %v116
    %v147 = vpack.c.b16 %v119, %v117
    %v148 = vpack.c.b16 %v122, %v120
    %v149 = vpack.c.b16 %v123, %v121
    %v150 = vpack.c.b16 %v126, %v124
    %v151 = vpack.c.b16 %v127, %v125
    %v152 = vpack.c.b16 %v130, %v128
    %v153 = vpack.c.b16 %v131, %v129
    %v154 = vpack.c.b16 %v134, %v132
    %v155 = vpack.c.b16 %v135, %v133
    %v156 = vpack.c.b16 %v138, %v136
    %v157 = vpack.c.b16 %v139, %v137
    %v158 = vpack.c.b16 %v142, %v140
    %v159 = vpack.c.b16 %v143, %v141
    %176 = vmatprep.subr.bf16.mxu0 %v159
    %177 = vmatpush1.bf16.msra.mxu0 %v158
    %178 = vmatprep.subr.bf16.mxu0 %v157
    %179 = vmatpush1.bf16.msra.mxu0 %v156
    %180 = vmatprep.subr.bf16.mxu0 %v155
    %181 = vmatpush1.bf16.msra.mxu0 %v154
    %182 = vmatprep.subr.bf16.mxu0 %v153
    %183 = vmatpush1.bf16.msra.mxu0 %v152
    %184 = vmatprep.subr.bf16.mxu0 %v151
    %185 = vmatpush1.bf16.msra.mxu0 %v150
    %186 = vmatprep.subr.bf16.mxu0 %v149
    %187 = vmatpush1.bf16.msra.mxu0 %v148
    %188 = vmatprep.subr.bf16.mxu0 %v147
    %189 = vmatpush1.bf16.msra.mxu0 %v146
    %190 = vmatprep.subr.bf16.mxu0 %v145
    %191 = vmatpush1.bf16.msra.mxu0 %v144
    %192 = vmatprep.subr.bf16.mxu0 0
    %193 = vmatpush2.bf16.msra.mxu0 0
    %194 = vmatprep.subr.bf16.mxu0 0
    %195 = vmatpush2.bf16.msra.mxu0 0
    %196 = vmatprep.subr.bf16.mxu0 0
    %197 = vmatpush2.bf16.msra.mxu0 0
    %198 = vmatprep.subr.bf16.mxu0 0
    %199 = vmatpush2.bf16.msra.mxu0 0
    %200 = vmatprep.subr.bf16.mxu0 0
    %201 = vmatpush2.bf16.msra.mxu0 0
    %202 = vmatprep.subr.bf16.mxu0 0
    %203 = vmatpush2.bf16.msra.mxu0 0
    %204 = vmatprep.subr.bf16.mxu0 0
    %205 = vmatpush2.bf16.msra.mxu0 0
    %206 = vmatprep.subr.bf16.mxu0 0
    %207 = vmatpush2.bf16.msra.mxu0 0
    %208 = vmatprep.mubr.bf16.mxu0 0
    %209 = vmatmul.mubr.bf16.gmra.mxu0 %v68
    %v210 = vpop.f32.mrf.mxu0
    %v211 = vadd.f32 %v89, %v210
    %v212 = vpop.f32.mrf.mxu0
    %v213 = vadd.f32 %v93, %v212
    %v214 = vpop.f32.mrf.mxu0
    %v215 = vpop.f32.mrf.mxu0
    %216 = vdwg.mxu0
    %v217 = vmax.f32 %v211, 0.0
    %v218 = vmax.f32 %v213, 0.0
    %v219 = vpack.c.bf16 %v217, %v217
    %v220 = vpack.c.bf16 %v218, %v218
    %v221 = vld [vmem:[#allocation6] sm:$0xff]
    %v222 = vld [vmem:[#allocation6 + $0x8] sm:$0xff]
    %v223 = vld [vmem:[#allocation6 + $0x10] sm:$0xff]
    %v224 = vld [vmem:[#allocation6 + $0x18] sm:$0xff]
    %v225 = vld [vmem:[#allocation6 + $0x20] sm:$0xff]
    %v226 = vld [vmem:[#allocation6 + $0x28] sm:$0xff]
    %v227 = vld [vmem:[#allocation6 + $0x30] sm:$0xff]
    %v228 = vld [vmem:[#allocation6 + $0x38] sm:$0xff]
    %v229 = vld [vmem:[#allocation6 + $0x40] sm:$0xff]
    %v230 = vld [vmem:[#allocation6 + $0x48] sm:$0xff]
    %v231 = vld [vmem:[#allocation6 + $0x50] sm:$0xff]
    %v232 = vld [vmem:[#allocation6 + $0x58] sm:$0xff]
    %v233 = vld [vmem:[#allocation6 + $0x60] sm:$0xff]
    %v234 = vld [vmem:[#allocation6 + $0x68] sm:$0xff]
    %v235 = vld [vmem:[#allocation6 + $0x70] sm:$0xff]
    %v236 = vld [vmem:[#allocation6 + $0x78] sm:$0xff]
    %v237 = vld [vmem:[#allocation6 + $0x80] sm:$0xff]
    %v238 = vld [vmem:[#allocation6 + $0x88] sm:$0xff]
    %v239 = vld [vmem:[#allocation6 + $0x90] sm:$0xff]
    %v240 = vld [vmem:[#allocation6 + $0x98] sm:$0xff]
    %v241 = vld [vmem:[#allocation6 + $0xa0] sm:$0xff]
    %v242 = vld [vmem:[#allocation6 + $0xa8] sm:$0xff]
    %v243 = vld [vmem:[#allocation6 + $0xb0] sm:$0xff]
    %v244 = vld [vmem:[#allocation6 + $0xb8] sm:$0xff]
    %v245 = vld [vmem:[#allocation6 + $0xc0] sm:$0xff]
    %v246 = vld [vmem:[#allocation6 + $0xc8] sm:$0xff]
    %v247 = vld [vmem:[#allocation6 + $0xd0] sm:$0xff]
    %v248 = vld [vmem:[#allocation6 + $0xd8] sm:$0xff]
    %v249 = vld [vmem:[#allocation6 + $0xe0] sm:$0xff]
    %v250 = vld [vmem:[#allocation6 + $0xe8] sm:$0xff]
    %v251 = vld [vmem:[#allocation6 + $0xf0] sm:$0xff]
    %v252 = vld [vmem:[#allocation6 + $0xf8] sm:$0xff]
    %v254 = vlaneseq
    %v255 = vshrl.u32 %v254, 7
    %v256 = vsub.s32 0, %v255
    %v257 = vrot.slane %v66, %v256
    %v258 = vlaneseq
    %v259 = vshrl.u32 %v258, 7
    %v260 = vsub.s32 1, %v259
    %v261 = vrot.slane %v66, %v260
    %v296 = vunpack.c.l.b16 %v221
    %v297 = vunpack.c.h.b16 %v221
    %v298 = vunpack.c.l.b16 %v222
    %v299 = vunpack.c.h.b16 %v222
    %v300 = vunpack.c.l.b16 %v223
    %v301 = vunpack.c.h.b16 %v223
    %v302 = vunpack.c.l.b16 %v224
    %v303 = vunpack.c.h.b16 %v224
    %v304 = vunpack.c.l.b16 %v225
    %v305 = vunpack.c.h.b16 %v225
    %v306 = vunpack.c.l.b16 %v226
    %v307 = vunpack.c.h.b16 %v226
    %v308 = vunpack.c.l.b16 %v227
    %v309 = vunpack.c.h.b16 %v227
    %v310 = vunpack.c.l.b16 %v228
    %v311 = vunpack.c.h.b16 %v228
    %v312 = vunpack.c.l.b16 %v229
    %v313 = vunpack.c.h.b16 %v229
    %v314 = vunpack.c.l.b16 %v230
    %v315 = vunpack.c.h.b16 %v230
    %v316 = vunpack.c.l.b16 %v231
    %v317 = vunpack.c.h.b16 %v231
    %v318 = vunpack.c.l.b16 %v232
    %v319 = vunpack.c.h.b16 %v232
    %v320 = vunpack.c.l.b16 %v233
    %v321 = vunpack.c.h.b16 %v233
    %v322 = vunpack.c.l.b16 %v234
    %v323 = vunpack.c.h.b16 %v234
    %v324 = vunpack.c.l.b16 %v235
    %v325 = vunpack.c.h.b16 %v235
    %v326 = vunpack.c.l.b16 %v236
    %v327 = vunpack.c.h.b16 %v236
    %v328 = vunpack.c.l.b16 %v237
    %v329 = vunpack.c.h.b16 %v237
    %v330 = vunpack.c.l.b16 %v238
    %v331 = vunpack.c.h.b16 %v238
    %v332 = vunpack.c.l.b16 %v239
    %v333 = vunpack.c.h.b16 %v239
    %v334 = vunpack.c.l.b16 %v240
    %v335 = vunpack.c.h.b16 %v240
    %v336 = vunpack.c.l.b16 %v241
    %v337 = vunpack.c.h.b16 %v241
    %v338 = vunpack.c.l.b16 %v242
    %v339 = vunpack.c.h.b16 %v242
    %v340 = vunpack.c.l.b16 %v243
    %v341 = vunpack.c.h.b16 %v243
    %v342 = vunpack.c.l.b16 %v244
    %v343 = vunpack.c.h.b16 %v244
    %v344 = vunpack.c.l.b16 %v245
    %v345 = vunpack.c.h.b16 %v245
    %v346 = vunpack.c.l.b16 %v246
    %v347 = vunpack.c.h.b16 %v246
    %v348 = vunpack.c.l.b16 %v247
    %v349 = vunpack.c.h.b16 %v247
    %v350 = vunpack.c.l.b16 %v248
    %v351 = vunpack.c.h.b16 %v248
    %v352 = vunpack.c.l.b16 %v249
    %v353 = vunpack.c.h.b16 %v249
    %v354 = vunpack.c.l.b16 %v250
    %v355 = vunpack.c.h.b16 %v250
    %v356 = vunpack.c.l.b16 %v251
    %v357 = vunpack.c.h.b16 %v251
    %v358 = vunpack.c.l.b16 %v252
    %v359 = vunpack.c.h.b16 %v252
    %v360 = vpack.c.b16 %v298, %v296
    %v361 = vpack.c.b16 %v299, %v297
    %v362 = vpack.c.b16 %v302, %v300
    %v363 = vpack.c.b16 %v303, %v301
    %v364 = vpack.c.b16 %v306, %v304
    %v365 = vpack.c.b16 %v307, %v305
    %v366 = vpack.c.b16 %v310, %v308
    %v367 = vpack.c.b16 %v311, %v309
    %v368 = vpack.c.b16 %v314, %v312
    %v369 = vpack.c.b16 %v315, %v313
    %v370 = vpack.c.b16 %v318, %v316
    %v371 = vpack.c.b16 %v319, %v317
    %v372 = vpack.c.b16 %v322, %v320
    %v373 = vpack.c.b16 %v323, %v321
    %v374 = vpack.c.b16 %v326, %v324
    %v375 = vpack.c.b16 %v327, %v325
    %v376 = vpack.c.b16 %v330, %v328
    %v377 = vpack.c.b16 %v331, %v329
    %v378 = vpack.c.b16 %v334, %v332
    %v379 = vpack.c.b16 %v335, %v333
    %v380 = vpack.c.b16 %v338, %v336
    %v381 = vpack.c.b16 %v339, %v337
    %v382 = vpack.c.b16 %v342, %v340
    %v383 = vpack.c.b16 %v343, %v341
    %v384 = vpack.c.b16 %v346, %v344
    %v385 = vpack.c.b16 %v347, %v345
    %v386 = vpack.c.b16 %v350, %v348
    %v387 = vpack.c.b16 %v351, %v349
    %v388 = vpack.c.b16 %v354, %v352
    %v389 = vpack.c.b16 %v355, %v353
    %v390 = vpack.c.b16 %v358, %v356
    %v391 = vpack.c.b16 %v359, %v357
    %424 = vmatprep.subr.bf16.mxu0 %v375
    %425 = vmatpush1.bf16.msra.mxu0 %v374
    %426 = vmatprep.subr.bf16.mxu0 %v373
    %427 = vmatpush1.bf16.msra.mxu0 %v372
    %428 = vmatprep.subr.bf16.mxu0 %v371
    %429 = vmatpush1.bf16.msra.mxu0 %v370
    %430 = vmatprep.subr.bf16.mxu0 %v369
    %431 = vmatpush1.bf16.msra.mxu0 %v368
    %432 = vmatprep.subr.bf16.mxu0 %v367
    %433 = vmatpush1.bf16.msra.mxu0 %v366
    %434 = vmatprep.subr.bf16.mxu0 %v365
    %435 = vmatpush1.bf16.msra.mxu0 %v364
    %436 = vmatprep.subr.bf16.mxu0 %v363
    %437 = vmatpush1.bf16.msra.mxu0 %v362
    %438 = vmatprep.subr.bf16.mxu0 %v361
    %439 = vmatpush1.bf16.msra.mxu0 %v360
    %440 = vmatprep.subr.bf16.mxu0 %v391
    %441 = vmatpush2.bf16.msra.mxu0 %v390
    %442 = vmatprep.subr.bf16.mxu0 %v389
    %443 = vmatpush2.bf16.msra.mxu0 %v388
    %444 = vmatprep.subr.bf16.mxu0 %v387
    %445 = vmatpush2.bf16.msra.mxu0 %v386
    %446 = vmatprep.subr.bf16.mxu0 %v385
    %447 = vmatpush2.bf16.msra.mxu0 %v384
    %448 = vmatprep.subr.bf16.mxu0 %v383
    %449 = vmatpush2.bf16.msra.mxu0 %v382
    %450 = vmatprep.subr.bf16.mxu0 %v381
    %451 = vmatpush2.bf16.msra.mxu0 %v380
    %452 = vmatprep.subr.bf16.mxu0 %v379
    %453 = vmatpush2.bf16.msra.mxu0 %v378
    %454 = vmatprep.subr.bf16.mxu0 %v377
    %455 = vmatpush2.bf16.msra.mxu0 %v376
    %456 = vmatprep.mubr.bf16.mxu0 %v220
    %457 = vmatmul.mubr.bf16.gmra.mxu0 %v219
    %v458 = vpop.f32.mrf.mxu0
    %v459 = vadd.f32 %v257, %v458
    %v460 = vpop.f32.mrf.mxu0
    %v461 = vadd.f32 %v261, %v460
    %v462 = vpop.f32.mrf.mxu0
    %v463 = vpop.f32.mrf.mxu0
    %464 = vdwg.mxu0
    %v465 = vmax.f32 %v459, 0.0
    %v466 = vmax.f32 %v461, 0.0
    %v467 = vpack.c.bf16 %v465, %v465
    %v468 = vpack.c.bf16 %v466, %v466
    %v469 = vld [vmem:[#allocation8] sm:$0xf]
    %v470 = vld [vmem:[#allocation8 + $0x4] sm:$0xf]
    %v471 = vld [vmem:[#allocation8 + $0x8] sm:$0xf]
    %v472 = vld [vmem:[#allocation8 + $0xc] sm:$0xf]
    %v473 = vld [vmem:[#allocation8 + $0x10] sm:$0xf]
    %v474 = vld [vmem:[#allocation8 + $0x14] sm:$0xf]
    %v475 = vld [vmem:[#allocation8 + $0x18] sm:$0xf]
    %v476 = vld [vmem:[#allocation8 + $0x1c] sm:$0xf]
    %v477 = vld [vmem:[#allocation8 + $0x20] sm:$0xf]
    %v478 = vld [vmem:[#allocation8 + $0x24] sm:$0xf]
    %v479 = vld [vmem:[#allocation8 + $0x28] sm:$0xf]
    %v480 = vld [vmem:[#allocation8 + $0x2c] sm:$0xf]
    %v481 = vld [vmem:[#allocation8 + $0x30] sm:$0xf]
    %v482 = vld [vmem:[#allocation8 + $0x34] sm:$0xf]
    %v483 = vld [vmem:[#allocation8 + $0x38] sm:$0xf]
    %v484 = vld [vmem:[#allocation8 + $0x3c] sm:$0xf]
    %v485 = vld [vmem:[#allocation8 + $0x40] sm:$0xf]
    %v486 = vld [vmem:[#allocation8 + $0x44] sm:$0xf]
    %v487 = vld [vmem:[#allocation8 + $0x48] sm:$0xf]
    %v488 = vld [vmem:[#allocation8 + $0x4c] sm:$0xf]
    %v489 = vld [vmem:[#allocation8 + $0x50] sm:$0xf]
    %v490 = vld [vmem:[#allocation8 + $0x54] sm:$0xf]
    %v491 = vld [vmem:[#allocation8 + $0x58] sm:$0xf]
    %v492 = vld [vmem:[#allocation8 + $0x5c] sm:$0xf]
    %v493 = vld [vmem:[#allocation8 + $0x60] sm:$0xf]
    %v494 = vld [vmem:[#allocation8 + $0x64] sm:$0xf]
    %v495 = vld [vmem:[#allocation8 + $0x68] sm:$0xf]
    %v496 = vld [vmem:[#allocation8 + $0x6c] sm:$0xf]
    %v497 = vld [vmem:[#allocation8 + $0x70] sm:$0xf]
    %v498 = vld [vmem:[#allocation8 + $0x74] sm:$0xf]
    %v499 = vld [vmem:[#allocation8 + $0x78] sm:$0xf]
    %v500 = vld [vmem:[#allocation8 + $0x7c] sm:$0xf]
    %v502 = vlaneseq
    %v503 = vshrl.u32 %v502, 7
    %v504 = vsub.s32 0, %v503
    %v505 = vrot.slane %v67, %v504
    %v539 = vunpack.c.l.b16 %v469
    %v540 = vunpack.c.l.b16 %v470
    %v541 = vunpack.c.l.b16 %v471
    %v542 = vunpack.c.l.b16 %v472
    %v543 = vunpack.c.l.b16 %v473
    %v544 = vunpack.c.l.b16 %v474
    %v545 = vunpack.c.l.b16 %v475
    %v546 = vunpack.c.l.b16 %v476
    %v547 = vunpack.c.l.b16 %v477
    %v548 = vunpack.c.l.b16 %v478
    %v549 = vunpack.c.l.b16 %v479
    %v550 = vunpack.c.l.b16 %v480
    %v551 = vunpack.c.l.b16 %v481
    %v552 = vunpack.c.l.b16 %v482
    %v553 = vunpack.c.l.b16 %v483
    %v554 = vunpack.c.l.b16 %v484
    %v555 = vunpack.c.l.b16 %v485
    %v556 = vunpack.c.l.b16 %v486
    %v557 = vunpack.c.l.b16 %v487
    %v558 = vunpack.c.l.b16 %v488
    %v559 = vunpack.c.l.b16 %v489
    %v560 = vunpack.c.l.b16 %v490
    %v561 = vunpack.c.l.b16 %v491
    %v562 = vunpack.c.l.b16 %v492
    %v563 = vunpack.c.l.b16 %v493
    %v564 = vunpack.c.l.b16 %v494
    %v565 = vunpack.c.l.b16 %v495
    %v566 = vunpack.c.l.b16 %v496
    %v567 = vunpack.c.l.b16 %v497
    %v568 = vunpack.c.l.b16 %v498
    %v569 = vunpack.c.l.b16 %v499
    %v570 = vunpack.c.l.b16 %v500
    %v571 = vpack.c.b16 %v540, %v539
    %v572 = vpack.c.b16 %v542, %v541
    %v573 = vpack.c.b16 %v544, %v543
    %v574 = vpack.c.b16 %v546, %v545
    %v575 = vpack.c.b16 %v548, %v547
    %v576 = vpack.c.b16 %v550, %v549
    %v577 = vpack.c.b16 %v552, %v551
    %v578 = vpack.c.b16 %v554, %v553
    %v579 = vpack.c.b16 %v556, %v555
    %v580 = vpack.c.b16 %v558, %v557
    %v581 = vpack.c.b16 %v560, %v559
    %v582 = vpack.c.b16 %v562, %v561
    %v583 = vpack.c.b16 %v564, %v563
    %v584 = vpack.c.b16 %v566, %v565
    %v585 = vpack.c.b16 %v568, %v567
    %v586 = vpack.c.b16 %v570, %v569
    %603 = vmatprep.subr.bf16.mxu0 0
    %604 = vmatpush1.bf16.msra.mxu0 %v578
    %605 = vmatprep.subr.bf16.mxu0 0
    %606 = vmatpush1.bf16.msra.mxu0 %v577
    %607 = vmatprep.subr.bf16.mxu0 0
    %608 = vmatpush1.bf16.msra.mxu0 %v576
    %609 = vmatprep.subr.bf16.mxu0 0
    %610 = vmatpush1.bf16.msra.mxu0 %v575
    %611 = vmatprep.subr.bf16.mxu0 0
    %612 = vmatpush1.bf16.msra.mxu0 %v574
    %613 = vmatprep.subr.bf16.mxu0 0
    %614 = vmatpush1.bf16.msra.mxu0 %v573
    %615 = vmatprep.subr.bf16.mxu0 0
    %616 = vmatpush1.bf16.msra.mxu0 %v572
    %617 = vmatprep.subr.bf16.mxu0 0
    %618 = vmatpush1.bf16.msra.mxu0 %v571
    %619 = vmatprep.subr.bf16.mxu0 0
    %620 = vmatpush2.bf16.msra.mxu0 %v586
    %621 = vmatprep.subr.bf16.mxu0 0
    %622 = vmatpush2.bf16.msra.mxu0 %v585
    %623 = vmatprep.subr.bf16.mxu0 0
    %624 = vmatpush2.bf16.msra.mxu0 %v584
    %625 = vmatprep.subr.bf16.mxu0 0
    %626 = vmatpush2.bf16.msra.mxu0 %v583
    %627 = vmatprep.subr.bf16.mxu0 0
    %628 = vmatpush2.bf16.msra.mxu0 %v582
    %629 = vmatprep.subr.bf16.mxu0 0
    %630 = vmatpush2.bf16.msra.mxu0 %v581
    %631 = vmatprep.subr.bf16.mxu0 0
    %632 = vmatpush2.bf16.msra.mxu0 %v580
    %633 = vmatprep.subr.bf16.mxu0 0
    %634 = vmatpush2.bf16.msra.mxu0 %v579
    %635 = vmatprep.mubr.bf16.mxu0 %v468
    %636 = vmatmul.mubr.bf16.gmra.mxu0 %v467
    %v637 = vpop.f32.mrf.mxu0
    %v638 = vadd.f32 %v505, %v637
    %v639 = vpop.f32.mrf.mxu0
    %v640 = vpop.f32.mrf.mxu0
    %v641 = vpop.f32.mrf.mxu0
    %642 = vdwg.mxu0
    %s643 = sld [smem:[#allocation3]]
    %v644 = vlaneseq
    %v645 = vshrl.u32 %v644, 7
    %v646 = vstv %s643
    %vm647 = vcmp.lt.s32.totalorder %v645, %v646
    %v648 = vsel %vm647, 1, 0
    %v649 = vcvt.s32.f32 %v648
    %v650 = vrot.slane %v638, 4
    %v651 = vmax.f32 %v638, %v650
    %v652 = vrot.slane %v651, 2
    %v653 = vmax.f32 %v651, %v652
    %v654 = vrot.slane %v653, 1
    %v655 = vmax.f32 %v653, %v654
    %v656 = vsub.f32 %v638, %v655
    %v657 = vmul.f32 %v656, 1.442695
    %v658 = vpow.pop %v657
    %v659 = vmul.f32 %v658, %v649
    %v660 = vrot.slane %v659, 4
    %v661 = vadd.f32 %v659, %v660
    %v662 = vrot.slane %v661, 2
    %v663 = vadd.f32 %v661, %v662
    %v664 = vrot.slane %v663, 1
    %v665 = vadd.f32 %v663, %v664
    %v666 = vrcp.pop %v665
    %v667 = vmul.f32 %v658, %v666
    %668 = vst [vmem:[%s6] sm:$0xff] %v667
    // Predicated region
    $region34: #{actor_forward.1} parent=1 // pred_check
      _
    $region35: #{actor_forward.1} parent=1 // pred_check_branch
      %670 = sbr.rel (0) target = $region37
    $region36: #{actor_forward.1} parent=1 // pred_region
      _
    $region37: #{actor_forward.1} parent=1 // pred_fallthru
      _
    // Predicated region
    $region38: #{actor_forward.1} parent=1 // pred_check
      _
    $region39: #{actor_forward.1} parent=1 // pred_check_branch
      %672 = sbr.rel (0) target = $region41
    $region40: #{actor_forward.1} parent=1 // pred_region
      _
    $region41: #{actor_forward.1} parent=1 // pred_fallthru
      _
    %673 = vsyncpa [#allocation5], 1
    %674 = vsyncpa [#allocation7], 1

</llo_original>
